<compile_context>
chip_gen: v5e
topology: v5e:2x2
jax: 0.10.0
libtpu: 0.0.40
codegen_flags: <defaults>
</compile_context>

<pallas_src>
import functools
import math

import jax
import jax.numpy as jnp
from jax.experimental import pallas as pl
from jax.experimental.pallas import tpu as pltpu

# ----- model hyper-parameters (small, consistent with the module's __init__) -----
EMB = 32            # embedding_dim
HEADS = 4           # head_num
QKV = 8             # qkv_dim  (HEADS * QKV == EMB)
SQRT_EMB = math.sqrt(EMB)      # model_params['sqrt_embedding_dim']
LOGIT_CLIP = 10.0              # model_params['logit_clipping']
NUM_EXPERTS = 4
FF_HIDDEN = 16
TOPK = 2

HD = HEADS * QKV               # 32
NEF = NUM_EXPERTS * FF_HIDDEN  # 64

# row offsets inside the packed grid-invariant constant buffer (lane width = 64)
_WQ_R0 = 0                     # rows [0, EMB)        : Wq_last          (EMB, HD)
_W1_R0 = _WQ_R0 + EMB          # rows [32, 64)        : expert W1 stack  (HD, NEF)
_W2_R0 = _W1_R0 + HD           # rows [64, 128)       : expert W2 stack  (NEF, EMB)
_B1_R0 = _W2_R0 + NEF          # row  128             : expert b1 stack  (1, NEF)
_SEG_R0 = _B1_R0 + 8           # rows [136, 136+HM)   : segment-sum ones (HM, HM)


def _multi_tensorcore_chip():
    """True when a 'parallel' batch grid maps onto >1 TensorCore (v4/v5p megacore, v7x).
    Single-TC chips (v5e, v6e) -> collapse the grid to one step. Unknown -> collapse
    (always correct, only loses the 2x core split)."""
    try:
        kind = jax.devices()[0].device_kind.lower()
    except Exception:
        return False
    if any(t in kind for t in ("lite", "v5e", "v6e")):
        return False
    return any(t in kind for t in ("v7", "v4", "v5p", "v5"))


# ------------------------------------------------------------------ fused Pallas kernel
def _decoder_kernel(last_ref, qf_ref, kbd_ref, vbd_ref, mask_ref, shk_ref,
                    gate_ref, const_ref, out_ref, *, block_b, n, hm):
    """Fused decoder step for `block_b` batch elements.

    Block shapes (grid over batch groups g):
      last_ref (block_b,N,E)   qf_ref (block_b,N,HD)
      kbd_ref  (block_b,HD,HM) vbd_ref (block_b,HM,HD)
      mask_ref (block_b,2N,MW) rows 0:N head-tiled ninf mask, rows N:2N padded 1-head mask
      shk_ref  (block_b,E,MW)  gate_ref (block_b,2,64)  row0 = gate-per-expert, row1 = gates@b2
      const_ref (R,64)         packed Wq_last / W1 / W2 / b1 / segsum
      out_ref  (block_b,N,MW)
    """
    f32 = jnp.float32
    rows = block_b * n

    # grid-invariant constants: static, lane-0-aligned sub-views of one packed buffer
    wq = const_ref[_WQ_R0:_WQ_R0 + EMB, 0:HD]          # (E, H*D)
    w1 = const_ref[_W1_R0:_W1_R0 + HD, 0:NEF]          # (H*D, n_exp*F)
    w2 = const_ref[_W2_R0:_W2_R0 + NEF, 0:EMB]         # (n_exp*F, E)
    b1 = const_ref[_B1_R0:_B1_R0 + 1, 0:NEF]           # (1, n_exp*F)
    seg = const_ref[_SEG_R0:_SEG_R0 + hm, 0:hm]        # per-head ones blocks (H*M, H*M)

    # ---- q_last projection + q_first add: all block_b*N rows in one tall MXU push
    last_all = last_ref[...].reshape(rows, EMB)
    qf_all = qf_ref[...].reshape(rows, HD)
    q_all = qf_all + jnp.dot(last_all, wq, preferred_element_type=f32)       # (rows, H*D)

    # ---- multi-head attention: per-batch block-diagonal matmuls (unrolled over b)
    # 1/sqrt(qkv_dim) already folded into kbd at set_kv.
    # TODO(synk): the (H*M, H*M) segsum + block-diag K/V trick is O(M^2) in VMEM/FLOPs;
    # replace with per-head lane reductions once M grows past ~100 (v7x has 64 MiB VMEM).
    oc, sh_masks = [], []
    for b in range(block_b):
        qb = q_all[b * n:(b + 1) * n]                                        # (n, H*D)
        maskb = mask_ref[b]                                                  # (2n, MW)
        sh_masks.append(maskb[n:, :])
        s = jnp.dot(qb, kbd_ref[b], preferred_element_type=f32) + maskb[0:n, 0:hm]
        # global row max == per-head max unless one head underflows (guarded below)
        s = s - jnp.max(s, axis=-1, keepdims=True)
        p = jnp.exp(s)
        denom = jnp.dot(p, seg, preferred_element_type=f32)                  # per-head sums
        w = p / jnp.maximum(denom, 1e-30)
        oc.append(jnp.dot(w, vbd_ref[b], preferred_element_type=f32))        # (n, H*D)
    out_all = jnp.concatenate(oc, axis=0) if block_b > 1 else oc[0]          # (rows, H*D)

    # ---- MoE combine: tall shared-weight matmuls, per-batch gates applied on row blocks
    gate_vals = gate_ref[...]                                                # (block_b, 2, 64)
    g_rows = [jnp.broadcast_to(gate_vals[b, 0:1, 0:NEF], (n, NEF)) for b in range(block_b)]
    g_all = jnp.concatenate(g_rows, axis=0) if block_b > 1 else g_rows[0]    # (rows, NEF)
    h1 = jnp.maximum(jnp.dot(out_all, w1, preferred_element_type=f32) + b1, 0.0)
    mh = jnp.dot(h1 * g_all, w2, preferred_element_type=f32)                 # (rows, E)

    # ---- single-head score + tanh clip + masked softmax (lane-dense, M padded to MW)
    # 1/sqrt(embedding_dim) already folded into shk at set_kv.
    for b in range(block_b):
        mh_b = mh[b * n:(b + 1) * n] + gate_vals[b, 1:2, 0:EMB]              # + gates @ b2
        score = jnp.dot(mh_b, shk_ref[b], preferred_element_type=f32)        # (n, MW)
        score = LOGIT_CLIP * jnp.tanh(score) + sh_masks[b]
        score = score - jnp.max(score, axis=-1, keepdims=True)
        e = jnp.exp(score)
        out_ref[b] = (e / jnp.sum(e, axis=-1, keepdims=True)).astype(out_ref.dtype)


def fused_decoder_pallas(last, qf, kbd, vbd, mask_pack, shk_pad, gate_pack, const_pack,
                         *, hm, m, mw):
    B, N, E = last.shape
    cw = const_pack.shape[1]

    # collapse the batch grid on single-TC chips; keep 2-way parallel grid on v4/v5p/v7x
    block_b = 1 if (_multi_tensorcore_chip() and B > 1) else B
    steps = B // block_b

    kernel = functools.partial(_decoder_kernel, block_b=block_b, n=N, hm=hm)

    flops = int(2 * B * N * (E * HD + HD * hm + hm * hm + hm * HD + HD * NEF + NEF * E + E * mw))
    transc = int(B * N * (hm + 2 * mw))
    args = (last, qf, kbd, vbd, mask_pack, shk_pad, gate_pack, const_pack)
    bytes_acc = int(sum(int(x.size) * 4 for x in args) + B * N * mw * 4)

    out = pl.pallas_call(
        kernel,
        out_shape=jax.ShapeDtypeStruct((B, N, mw), jnp.float32),
        grid=(steps,),
        in_specs=[
            pl.BlockSpec((block_b, N, E), lambda g: (g, 0, 0)),        # encoded_last_node
            pl.BlockSpec((block_b, N, HD), lambda g: (g, 0, 0)),       # q_first (flat heads)
            pl.BlockSpec((block_b, HD, hm), lambda g: (g, 0, 0)),      # block-diag K^T (scaled)
            pl.BlockSpec((block_b, hm, HD), lambda g: (g, 0, 0)),      # block-diag V
            pl.BlockSpec((block_b, 2 * N, mw), lambda g: (g, 0, 0)),   # packed ninf masks
            pl.BlockSpec((block_b, E, mw), lambda g: (g, 0, 0)),       # single_head_key (scaled, padded)
            pl.BlockSpec((block_b, 2, cw), lambda g: (g, 0, 0)),       # per-batch gate vectors
            pl.BlockSpec(const_pack.shape, lambda g: (0, 0)),          # packed invariant weights
        ],
        out_specs=pl.BlockSpec((block_b, N, mw), lambda g: (g, 0, 0)),
        compiler_params=pltpu.CompilerParams(dimension_semantics=("parallel",)),
        cost_estimate=pl.CostEstimate(flops=flops, transcendentals=transc,
                                      bytes_accessed=bytes_acc),
    )(*args)
    return out[:, :, :m]


# ------------------------------------------------------------------ JAX glue
def reshape_by_heads(x, head_num):
    B, n, _ = x.shape
    return x.reshape(B, n, head_num, -1).transpose(0, 2, 1, 3)   # (B, H, n, D)


class TSPDecoderPallas:
    def __init__(self, key):
        keys = jax.random.split(key, 10)

        def lin(k, fan_in, fan_out):
            bound = 1.0 / math.sqrt(fan_in)
            return jax.random.uniform(k, (fan_in, fan_out), jnp.float32, -bound, bound)

        self.Wq_first = lin(keys[0], EMB, HD)
        self.Wq_last = lin(keys[1], EMB, HD)
        self.Wk = lin(keys[2], EMB, HD)
        self.Wv = lin(keys[3], EMB, HD)

        # hyper_multi_head_combine (MoE): experts = 2-layer MLPs (H*D -> FF -> E),
        # gated from the preference embedding.
        # TODO(synk): MoE class source not provided; implemented as a deterministic
        # top-k softmax-gated dense MLP mixture with cv^2 load-balance loss
        # (noisy gating omitted -> deterministic forward).
        self.Wg = lin(keys[4], EMB, NUM_EXPERTS)
        self.W1 = jax.random.uniform(keys[5], (NUM_EXPERTS, HD, FF_HIDDEN), jnp.float32, -0.1, 0.1)
        self.b1 = jax.random.uniform(keys[6], (NUM_EXPERTS, FF_HIDDEN), jnp.float32, -0.1, 0.1)
        self.W2 = jax.random.uniform(keys[7], (NUM_EXPERTS, FF_HIDDEN, EMB), jnp.float32, -0.1, 0.1)
        self.b2 = jax.random.uniform(keys[8], (NUM_EXPERTS, EMB), jnp.float32, -0.1, 0.1)

        # kernel-friendly stacked expert weights
        self.W1_flat = jnp.transpose(self.W1, (1, 0, 2)).reshape(HD, NEF)   # cols e*F:(e+1)*F = W1[e]
        self.b1_flat = self.b1.reshape(1, NEF)
        self.W2_stack = self.W2.reshape(NEF, EMB)                           # rows e*F:(e+1)*F = W2[e]

        self.kbd = self.vbd = self.shk_pad = self.q_first_flat = None
        self.k_heads = self.v_heads = self.single_head_key_ref = None
        self.const_pack = None
        self.m = self.hm = self.mw = self.cw = None

    # ---- episode setup ------------------------------------------------------
    def set_kv(self, encoded_nodes):
        B, M, _ = encoded_nodes.shape
        HM = HEADS * M
        k = reshape_by_heads(encoded_nodes @ self.Wk, HEADS)     # (B, H, M, D)
        v = reshape_by_heads(encoded_nodes @ self.Wv, HEADS)     # (B, H, M, D)
        self.k_heads, self.v_heads = k, v                        # unscaled, for pure-JAX reference

        # block-diagonal K^T (scale folded) and V: one MXU push per phase per batch
        inv_sqrt_d = 1.0 / math.sqrt(QKV)
        kbd = jnp.zeros((B, HD, HM), jnp.float32)
        vbd = jnp.zeros((B, HM, HD), jnp.float32)
        for h in range(HEADS):
            kbd = kbd.at[:, h * QKV:(h + 1) * QKV, h * M:(h + 1) * M].set(
                jnp.swapaxes(k[:, h], 1, 2) * inv_sqrt_d)
            vbd = vbd.at[:, h * M:(h + 1) * M, h * QKV:(h + 1) * QKV].set(v[:, h])
        self.kbd, self.vbd = kbd, vbd

        shk = jnp.transpose(encoded_nodes, (0, 2, 1))            # (B, E, M)
        self.single_head_key_ref = shk                           # unscaled, for reference
        # lane-dense padded single-head key (1/sqrt(E) folded, zero-padded to MW lanes)
        MW = max(128, -(-max(HM, M) // 128) * 128)
        self.shk_pad = jnp.zeros((B, EMB, MW), jnp.float32).at[:, :, :M].set(shk / SQRT_EMB)

        # segment-sum matrix: ones inside each head's M-column block
        idx = jnp.arange(HM) // M
        segsum = (idx[:, None] == idx[None, :]).astype(jnp.float32)

        # pack grid-invariant constants into one buffer, all sub-views lane-0 aligned
        cw = max(HD, NEF, EMB, HM)                               # 64
        rows = _SEG_R0 + HM
        cp = jnp.zeros((rows, cw), jnp.float32)
        cp = cp.at[_WQ_R0:_WQ_R0 + EMB, :HD].set(self.Wq_last)
        cp = cp.at[_W1_R0:_W1_R0 + HD, :NEF].set(self.W1_flat)
        cp = cp.at[_W2_R0:_W2_R0 + NEF, :EMB].set(self.W2_stack)
        cp = cp.at[_B1_R0, :NEF].set(self.b1_flat[0])
        cp = cp.at[_SEG_R0:_SEG_R0 + HM, :HM].set(segsum)
        self.const_pack = cp

        self.m, self.hm, self.mw, self.cw = M, HM, MW, cw

    def set_q1(self, encoded_q1):
        # flat head layout (B, N, H*D): column h*D+d == q_first[b, h, n, d]
        self.q_first_flat = encoded_q1 @ self.Wq_first

    # ---- gating (depends only on the preference embedding) ------------------
    def _gates(self, pref):
        logits = pref @ self.Wg                                   # (B, n_exp)
        gates = jax.nn.softmax(logits, axis=-1)
        _, top_idx = jax.lax.top_k(gates, TOPK)
        keep = jnp.sum(jax.nn.one_hot(top_idx, NUM_EXPERTS, dtype=gates.dtype), axis=1)
        gates = gates * keep
        return gates / jnp.sum(gates, axis=-1, keepdims=True)

    # ---- decoder step --------------------------------------------------------
    def forward(self, encoded_last_node, mid_embd_pref, ninf_mask):
        B, N, _ = encoded_last_node.shape
        M, HM, MW = self.m, self.hm, self.mw

        gates = self._gates(mid_embd_pref)                            # (B, n_exp)
        gexp = jnp.repeat(gates, FF_HIDDEN, axis=-1)                  # (B, NEF)
        gb2 = gates @ self.b2                                         # (B, E)
        gate_pack = jnp.zeros((B, 2, self.cw), jnp.float32)
        gate_pack = gate_pack.at[:, 0, :NEF].set(gexp).at[:, 1, :EMB].set(gb2)

        # packed masks: rows 0:N = head-tiled ninf mask (multi-head attention),
        # rows N:2N = single-head ninf mask padded to MW lanes with -1e9
        mask_pack = jnp.zeros((B, 2 * N, MW), jnp.float32)
        mask_pack = mask_pack.at[:, :N, :HM].set(jnp.tile(ninf_mask, (1, 1, HEADS)))
        mask_pack = mask_pack.at[:, N:, :].set(-1e9)
        mask_pack = mask_pack.at[:, N:, :M].set(ninf_mask)

        probs = fused_decoder_pallas(
            encoded_last_node, self.q_first_flat, self.kbd, self.vbd,
            mask_pack, self.shk_pad, gate_pack, self.const_pack,
            hm=HM, m=M, mw=MW)

        importance = jnp.sum(gates, axis=0)
        moe_loss = jnp.var(importance) / (jnp.mean(importance) ** 2 + 1e-10)
        return probs, moe_loss


# ------------------------------------------------------------------ pure-JAX reference
def _ref_forward(dec, encoded_last_node, mid_embd_pref, ninf_mask):
    B, N, _ = encoded_last_node.shape
    q_last = reshape_by_heads(encoded_last_node @ dec.Wq_last, HEADS)
    q_first = dec.q_first_flat.reshape(B, N, HEADS, QKV).transpose(0, 2, 1, 3)
    q = q_first + q_last                                          # (B, H, N, D)
    s = jnp.einsum('bhnd,bhmd->bhnm', q, dec.k_heads) / math.sqrt(QKV)
    s = s + ninf_mask[:, None, :, :]
    w = jax.nn.softmax(s, axis=-1)
    out = jnp.einsum('bhnm,bhmd->bhnd', w, dec.v_heads)
    out_concat = out.transpose(0, 2, 1, 3).reshape(B, N, HD)

    gates = dec._gates(mid_embd_pref)
    mh = jnp.zeros((B, N, EMB), jnp.float32)
    for e in range(NUM_EXPERTS):
        h = jax.nn.relu(out_concat @ dec.W1[e] + dec.b1[e])
        mh = mh + gates[:, e][:, None, None] * (h @ dec.W2[e] + dec.b2[e])
    importance = jnp.sum(gates, axis=0)
    moe_loss = jnp.var(importance) / (jnp.mean(importance) ** 2 + 1e-10)

    score = jnp.einsum('bne,bem->bnm', mh, dec.single_head_key_ref) / SQRT_EMB
    score = LOGIT_CLIP * jnp.tanh(score) + ninf_mask
    return jax.nn.softmax(score, axis=-1), moe_loss


if __name__ == "__main__":
    B, N, M = 2, 8, 16            # batch, pomo size, problem size
    key = jax.random.PRNGKey(0)
    k_param, k_nodes, k_q1, k_last, k_pref, k_mask = jax.random.split(key, 6)

    dec = TSPDecoderPallas(k_param)

    encoded_nodes = jax.random.normal(k_nodes, (B, M, EMB), jnp.float32)
    encoded_q1 = jax.random.normal(k_q1, (B, N, EMB), jnp.float32)
    encoded_last = jax.random.normal(k_last, (B, N, EMB), jnp.float32)
    mid_embd_pref = jax.random.normal(k_pref, (B, EMB), jnp.float32)
    # ninf mask: a few visited nodes get a huge negative penalty; column 0 always open
    mask_rand = jax.random.uniform(k_mask, (B, N, M))
    ninf_mask = jnp.where(mask_rand < 0.2, -1e9, 0.0).astype(jnp.float32)
    ninf_mask = ninf_mask.at[:, :, 0].set(0.0)

    dec.set_kv(encoded_nodes)
    dec.set_q1(encoded_q1)

    probs, moe_loss = dec.forward(encoded_last, mid_embd_pref, ninf_mask)
    jax.block_until_ready((probs, moe_loss))

    ref_probs, ref_loss = _ref_forward(dec, encoded_last, mid_embd_pref, ninf_mask)
    assert probs.shape == (B, N, M)
    assert bool(jnp.all(jnp.isfinite(probs)))
    assert bool(jnp.allclose(jnp.sum(probs, axis=-1), 1.0, atol=1e-5))
    assert bool(jnp.allclose(probs, ref_probs, atol=1e-4, rtol=1e-4))
    assert bool(jnp.allclose(moe_loss, ref_loss, atol=1e-6))

    print("KERNEL_OK")
</pallas_src>

<mosaic_0001>
module attributes {stable_mosaic.version = 11 : i64} {
  func.func @_decoder_kernel(%arg0: i32, %arg1: memref<2x8x32xf32, #tpu.memory_space<vmem>>, %arg2: memref<2x8x32xf32, #tpu.memory_space<vmem>>, %arg3: memref<2x32x64xf32, #tpu.memory_space<vmem>>, %arg4: memref<2x64x32xf32, #tpu.memory_space<vmem>>, %arg5: memref<2x16x128xf32, #tpu.memory_space<vmem>>, %arg6: memref<2x32x128xf32, #tpu.memory_space<vmem>>, %arg7: memref<2x2x64xf32, #tpu.memory_space<vmem>>, %arg8: memref<200x64xf32, #tpu.memory_space<vmem>>, %arg9: memref<2x8x128xf32, #tpu.memory_space<vmem>>) attributes {dimension_semantics = [#tpu.dimension_semantics<parallel>], iteration_bounds = array<i64: 1>, scalar_prefetch = 0 : i64, scratch_operands = 0 : i64, tpu.core_type = #tpu.core_type<tc>, window_params = [{transform_indices = @transform_0, window_bounds = array<i64: 2, 8, 32>}, {transform_indices = @transform_1, window_bounds = array<i64: 2, 8, 32>}, {transform_indices = @transform_2, window_bounds = array<i64: 2, 32, 64>}, {transform_indices = @transform_3, window_bounds = array<i64: 2, 64, 32>}, {transform_indices = @transform_4, window_bounds = array<i64: 2, 16, 128>}, {transform_indices = @transform_5, window_bounds = array<i64: 2, 32, 128>}, {transform_indices = @transform_6, window_bounds = array<i64: 2, 2, 64>}, {pipeline_mode = #tpu.pipeline_mode<synchronous>, transform_indices = @transform_7, window_bounds = array<i64: 200, 64>}, {transform_indices = @transform_8, window_bounds = array<i64: 2, 8, 128>}]} {
    %c0 = arith.constant 0 : index
    %c0_0 = arith.constant 0 : index
    %0 = vector.load %arg8[%c0, %c0_0] : memref<200x64xf32, #tpu.memory_space<vmem>>, vector<32x32xf32>
    %c32 = arith.constant 32 : index
    %c0_1 = arith.constant 0 : index
    %1 = vector.load %arg8[%c32, %c0_1] : memref<200x64xf32, #tpu.memory_space<vmem>>, vector<32x64xf32>
    %c64 = arith.constant 64 : index
    %c0_2 = arith.constant 0 : index
    %2 = vector.load %arg8[%c64, %c0_2] : memref<200x64xf32, #tpu.memory_space<vmem>>, vector<64x32xf32>
    %c128 = arith.constant 128 : index
    %c0_3 = arith.constant 0 : index
    %3 = vector.load %arg8[%c128, %c0_3] : memref<200x64xf32, #tpu.memory_space<vmem>>, vector<1x64xf32>
    %c136 = arith.constant 136 : index
    %c0_4 = arith.constant 0 : index
    %4 = vector.load %arg8[%c136, %c0_4] : memref<200x64xf32, #tpu.memory_space<vmem>>, vector<64x64xf32>
    %c0_5 = arith.constant 0 : index
    %c0_6 = arith.constant 0 : index
    %c0_7 = arith.constant 0 : index
    %5 = vector.load %arg1[%c0_5, %c0_6, %c0_7] : memref<2x8x32xf32, #tpu.memory_space<vmem>>, vector<2x8x32xf32>
    %6 = vector.shape_cast %5 : vector<2x8x32xf32> to vector<16x32xf32>
    %c0_8 = arith.constant 0 : index
    %c0_9 = arith.constant 0 : index
    %c0_10 = arith.constant 0 : index
    %7 = vector.load %arg2[%c0_8, %c0_9, %c0_10] : memref<2x8x32xf32, #tpu.memory_space<vmem>>, vector<2x8x32xf32>
    %8 = vector.shape_cast %7 : vector<2x8x32xf32> to vector<16x32xf32>
    %cst = arith.constant dense<0.000000e+00> : vector<16x32xf32>
    %9 = tpu.matmul %6, %0, %cst {dimension_numbers = #tpu.dot_dimension_numbers<[1], [0], [0], [1], [0, 0, 1, 1], [], []>} : vector<16x32xf32>, vector<32x32xf32>, vector<16x32xf32> -> vector<16x32xf32>
    %10 = arith.addf %8, %9 : vector<16x32xf32>
    %11 = vector.extract_strided_slice %10 {offsets = [0, 0], sizes = [8, 32], strides = [1, 1]} : vector<16x32xf32> to vector<8x32xf32>
    %c0_11 = arith.constant 0 : index
    %c0_12 = arith.constant 0 : index
    %c0_13 = arith.constant 0 : index
    %12 = vector.load %arg5[%c0_11, %c0_12, %c0_13] : memref<2x16x128xf32, #tpu.memory_space<vmem>>, vector<1x16x128xf32>
    %13 = vector.shape_cast %12 : vector<1x16x128xf32> to vector<16x128xf32>
    %14 = vector.extract_strided_slice %13 {offsets = [8, 0], sizes = [8, 128], strides = [1, 1]} : vector<16x128xf32> to vector<8x128xf32>
    %c0_14 = arith.constant 0 : index
    %c0_15 = arith.constant 0 : index
    %c0_16 = arith.constant 0 : index
    %15 = vector.load %arg3[%c0_14, %c0_15, %c0_16] : memref<2x32x64xf32, #tpu.memory_space<vmem>>, vector<1x32x64xf32>
    %16 = vector.shape_cast %15 : vector<1x32x64xf32> to vector<32x64xf32>
    %cst_17 = arith.constant dense<0.000000e+00> : vector<8x64xf32>
    %17 = tpu.matmul %11, %16, %cst_17 {dimension_numbers = #tpu.dot_dimension_numbers<[1], [0], [0], [1], [0, 0, 1, 1], [], []>} : vector<8x32xf32>, vector<32x64xf32>, vector<8x64xf32> -> vector<8x64xf32>
    %18 = vector.extract_strided_slice %13 {offsets = [0, 0], sizes = [8, 64], strides = [1, 1]} : vector<16x128xf32> to vector<8x64xf32>
    %19 = arith.addf %17, %18 : vector<8x64xf32>
    %cst_18 = arith.constant dense<0xFF800000> : vector<8xf32>
    %20 = vector.multi_reduction <maximumf>, %19, %cst_18 [1] : vector<8x64xf32> to vector<8xf32>
    %21 = vector.shape_cast %20 : vector<8xf32> to vector<8x1xf32>
    %22 = vector.broadcast %21 : vector<8x1xf32> to vector<8x64xf32>
    %23 = arith.subf %19, %22 : vector<8x64xf32>
    %24 = math.exp %23 : vector<8x64xf32>
    %cst_19 = arith.constant dense<0.000000e+00> : vector<8x64xf32>
    %25 = tpu.matmul %24, %4, %cst_19 {dimension_numbers = #tpu.dot_dimension_numbers<[1], [0], [0], [1], [0, 0, 1, 1], [], []>} : vector<8x64xf32>, vector<64x64xf32>, vector<8x64xf32> -> vector<8x64xf32>
    %cst_20 = arith.constant 1.000000e-30 : f32
    %26 = vector.broadcast %cst_20 : f32 to vector<8x64xf32>
    %27 = arith.maximumf %25, %26 : vector<8x64xf32>
    %28 = arith.divf %24, %27 : vector<8x64xf32>
    %c0_21 = arith.constant 0 : index
    %c0_22 = arith.constant 0 : index
    %c0_23 = arith.constant 0 : index
    %29 = vector.load %arg4[%c0_21, %c0_22, %c0_23] : memref<2x64x32xf32, #tpu.memory_space<vmem>>, vector<1x64x32xf32>
    %30 = vector.shape_cast %29 : vector<1x64x32xf32> to vector<64x32xf32>
    %cst_24 = arith.constant dense<0.000000e+00> : vector<8x32xf32>
    %31 = tpu.matmul %28, %30, %cst_24 {dimension_numbers = #tpu.dot_dimension_numbers<[1], [0], [0], [1], [0, 0, 1, 1], [], []>} : vector<8x64xf32>, vector<64x32xf32>, vector<8x32xf32> -> vector<8x32xf32>
    %32 = vector.extract_strided_slice %10 {offsets = [8, 0], sizes = [8, 32], strides = [1, 1]} : vector<16x32xf32> to vector<8x32xf32>
    %c1 = arith.constant 1 : index
    %c0_25 = arith.constant 0 : index
    %c0_26 = arith.constant 0 : index
    %33 = vector.load %arg5[%c1, %c0_25, %c0_26] : memref<2x16x128xf32, #tpu.memory_space<vmem>>, vector<1x16x128xf32>
    %34 = vector.shape_cast %33 : vector<1x16x128xf32> to vector<16x128xf32>
    %35 = vector.extract_strided_slice %34 {offsets = [8, 0], sizes = [8, 128], strides = [1, 1]} : vector<16x128xf32> to vector<8x128xf32>
    %c1_27 = arith.constant 1 : index
    %c0_28 = arith.constant 0 : index
    %c0_29 = arith.constant 0 : index
    %36 = vector.load %arg3[%c1_27, %c0_28, %c0_29] : memref<2x32x64xf32, #tpu.memory_space<vmem>>, vector<1x32x64xf32>
    %37 = vector.shape_cast %36 : vector<1x32x64xf32> to vector<32x64xf32>
    %cst_30 = arith.constant dense<0.000000e+00> : vector<8x64xf32>
    %38 = tpu.matmul %32, %37, %cst_30 {dimension_numbers = #tpu.dot_dimension_numbers<[1], [0], [0], [1], [0, 0, 1, 1], [], []>} : vector<8x32xf32>, vector<32x64xf32>, vector<8x64xf32> -> vector<8x64xf32>
    %39 = vector.extract_strided_slice %34 {offsets = [0, 0], sizes = [8, 64], strides = [1, 1]} : vector<16x128xf32> to vector<8x64xf32>
    %40 = arith.addf %38, %39 : vector<8x64xf32>
    %cst_31 = arith.constant dense<0xFF800000> : vector<8xf32>
    %41 = vector.multi_reduction <maximumf>, %40, %cst_31 [1] : vector<8x64xf32> to vector<8xf32>
    %42 = vector.shape_cast %41 : vector<8xf32> to vector<8x1xf32>
    %43 = vector.broadcast %42 : vector<8x1xf32> to vector<8x64xf32>
    %44 = arith.subf %40, %43 : vector<8x64xf32>
    %45 = math.exp %44 : vector<8x64xf32>
    %cst_32 = arith.constant dense<0.000000e+00> : vector<8x64xf32>
    %46 = tpu.matmul %45, %4, %cst_32 {dimension_numbers = #tpu.dot_dimension_numbers<[1], [0], [0], [1], [0, 0, 1, 1], [], []>} : vector<8x64xf32>, vector<64x64xf32>, vector<8x64xf32> -> vector<8x64xf32>
    %cst_33 = arith.constant 1.000000e-30 : f32
    %47 = vector.broadcast %cst_33 : f32 to vector<8x64xf32>
    %48 = arith.maximumf %46, %47 : vector<8x64xf32>
    %49 = arith.divf %45, %48 : vector<8x64xf32>
    %c1_34 = arith.constant 1 : index
    %c0_35 = arith.constant 0 : index
    %c0_36 = arith.constant 0 : index
    %50 = vector.load %arg4[%c1_34, %c0_35, %c0_36] : memref<2x64x32xf32, #tpu.memory_space<vmem>>, vector<1x64x32xf32>
    %51 = vector.shape_cast %50 : vector<1x64x32xf32> to vector<64x32xf32>
    %cst_37 = arith.constant dense<0.000000e+00> : vector<8x32xf32>
    %52 = tpu.matmul %49, %51, %cst_37 {dimension_numbers = #tpu.dot_dimension_numbers<[1], [0], [0], [1], [0, 0, 1, 1], [], []>} : vector<8x64xf32>, vector<64x32xf32>, vector<8x32xf32> -> vector<8x32xf32>
    %53 = tpu.concatenate %31, %52 in 0 : vector<8x32xf32>, vector<8x32xf32> -> vector<16x32xf32>
    %c0_38 = arith.constant 0 : index
    %c0_39 = arith.constant 0 : index
    %c0_40 = arith.constant 0 : index
    %54 = vector.load %arg7[%c0_38, %c0_39, %c0_40] : memref<2x2x64xf32, #tpu.memory_space<vmem>>, vector<2x2x64xf32>
    %55 = vector.extract_strided_slice %54 {offsets = [0, 0, 0], sizes = [1, 1, 64], strides = [1, 1, 1]} : vector<2x2x64xf32> to vector<1x1x64xf32>
    %56 = vector.shape_cast %55 : vector<1x1x64xf32> to vector<1x64xf32>
    %57 = vector.shape_cast %56 : vector<1x64xf32> to vector<1x64xf32>
    %58 = vector.broadcast %57 : vector<1x64xf32> to vector<8x64xf32>
    %59 = vector.extract_strided_slice %54 {offsets = [1, 0, 0], sizes = [1, 1, 64], strides = [1, 1, 1]} : vector<2x2x64xf32> to vector<1x1x64xf32>
    %60 = vector.shape_cast %59 : vector<1x1x64xf32> to vector<1x64xf32>
    %61 = vector.shape_cast %60 : vector<1x64xf32> to vector<1x64xf32>
    %62 = vector.broadcast %61 : vector<1x64xf32> to vector<8x64xf32>
    %63 = tpu.concatenate %58, %62 in 0 : vector<8x64xf32>, vector<8x64xf32> -> vector<16x64xf32>
    %cst_41 = arith.constant dense<0.000000e+00> : vector<16x64xf32>
    %64 = tpu.matmul %53, %1, %cst_41 {dimension_numbers = #tpu.dot_dimension_numbers<[1], [0], [0], [1], [0, 0, 1, 1], [], []>} : vector<16x32xf32>, vector<32x64xf32>, vector<16x64xf32> -> vector<16x64xf32>
    %65 = vector.broadcast %3 : vector<1x64xf32> to vector<16x64xf32>
    %66 = arith.addf %64, %65 : vector<16x64xf32>
    %cst_42 = arith.constant 0.000000e+00 : f32
    %67 = vector.broadcast %cst_42 : f32 to vector<16x64xf32>
    %68 = arith.maximumf %66, %67 : vector<16x64xf32>
    %69 = arith.mulf %68, %63 : vector<16x64xf32>
    %cst_43 = arith.constant dense<0.000000e+00> : vector<16x32xf32>
    %70 = tpu.matmul %69, %2, %cst_43 {dimension_numbers = #tpu.dot_dimension_numbers<[1], [0], [0], [1], [0, 0, 1, 1], [], []>} : vector<16x64xf32>, vector<64x32xf32>, vector<16x32xf32> -> vector<16x32xf32>
    %71 = vector.extract_strided_slice %70 {offsets = [0, 0], sizes = [8, 32], strides = [1, 1]} : vector<16x32xf32> to vector<8x32xf32>
    %72 = vector.extract_strided_slice %54 {offsets = [0, 1, 0], sizes = [1, 1, 32], strides = [1, 1, 1]} : vector<2x2x64xf32> to vector<1x1x32xf32>
    %73 = vector.shape_cast %72 : vector<1x1x32xf32> to vector<1x32xf32>
    %74 = vector.broadcast %73 : vector<1x32xf32> to vector<8x32xf32>
    %75 = arith.addf %71, %74 : vector<8x32xf32>
    %c0_44 = arith.constant 0 : index
    %c0_45 = arith.constant 0 : index
    %c0_46 = arith.constant 0 : index
    %76 = vector.load %arg6[%c0_44, %c0_45, %c0_46] : memref<2x32x128xf32, #tpu.memory_space<vmem>>, vector<1x32x128xf32>
    %77 = vector.shape_cast %76 : vector<1x32x128xf32> to vector<32x128xf32>
    %cst_47 = arith.constant dense<0.000000e+00> : vector<8x128xf32>
    %78 = tpu.matmul %75, %77, %cst_47 {dimension_numbers = #tpu.dot_dimension_numbers<[1], [0], [0], [1], [0, 0, 1, 1], [], []>} : vector<8x32xf32>, vector<32x128xf32>, vector<8x128xf32> -> vector<8x128xf32>
    %79 = math.tanh %78 : vector<8x128xf32>
    %cst_48 = arith.constant 1.000000e+01 : f32
    %80 = vector.broadcast %cst_48 : f32 to vector<8x128xf32>
    %81 = arith.mulf %80, %79 : vector<8x128xf32>
    %82 = arith.addf %81, %14 : vector<8x128xf32>
    %cst_49 = arith.constant dense<0xFF800000> : vector<8xf32>
    %83 = vector.multi_reduction <maximumf>, %82, %cst_49 [1] : vector<8x128xf32> to vector<8xf32>
    %84 = vector.shape_cast %83 : vector<8xf32> to vector<8x1xf32>
    %85 = vector.broadcast %84 : vector<8x1xf32> to vector<8x128xf32>
    %86 = arith.subf %82, %85 : vector<8x128xf32>
    %87 = math.exp %86 : vector<8x128xf32>
    %cst_50 = arith.constant dense<0.000000e+00> : vector<8xf32>
    %88 = vector.multi_reduction <add>, %87, %cst_50 [1] : vector<8x128xf32> to vector<8xf32>
    %89 = vector.shape_cast %88 : vector<8xf32> to vector<8x1xf32>
    %90 = vector.broadcast %89 : vector<8x1xf32> to vector<8x128xf32>
    %91 = arith.divf %87, %90 : vector<8x128xf32>
    %c0_51 = arith.constant 0 : index
    %c0_52 = arith.constant 0 : index
    %c0_53 = arith.constant 0 : index
    %92 = vector.load %arg9[%c0_51, %c0_52, %c0_53] : memref<2x8x128xf32, #tpu.memory_space<vmem>>, vector<1x8x128xf32>
    %93 = vector.shape_cast %92 : vector<1x8x128xf32> to vector<8x128xf32>
    %94 = vector.shape_cast %91 : vector<8x128xf32> to vector<1x8x128xf32>
    tpu.vector_store %arg9[%c0_51, %c0_52, %c0_53], %94 {strides = array<i32>} : memref<2x8x128xf32, #tpu.memory_space<vmem>>, vector<1x8x128xf32>,
    %95 = vector.extract_strided_slice %70 {offsets = [8, 0], sizes = [8, 32], strides = [1, 1]} : vector<16x32xf32> to vector<8x32xf32>
    %96 = vector.extract_strided_slice %54 {offsets = [1, 1, 0], sizes = [1, 1, 32], strides = [1, 1, 1]} : vector<2x2x64xf32> to vector<1x1x32xf32>
    %97 = vector.shape_cast %96 : vector<1x1x32xf32> to vector<1x32xf32>
    %98 = vector.broadcast %97 : vector<1x32xf32> to vector<8x32xf32>
    %99 = arith.addf %95, %98 : vector<8x32xf32>
    %c1_54 = arith.constant 1 : index
    %c0_55 = arith.constant 0 : index
    %c0_56 = arith.constant 0 : index
    %100 = vector.load %arg6[%c1_54, %c0_55, %c0_56] : memref<2x32x128xf32, #tpu.memory_space<vmem>>, vector<1x32x128xf32>
    %101 = vector.shape_cast %100 : vector<1x32x128xf32> to vector<32x128xf32>
    %cst_57 = arith.constant dense<0.000000e+00> : vector<8x128xf32>
    %102 = tpu.matmul %99, %101, %cst_57 {dimension_numbers = #tpu.dot_dimension_numbers<[1], [0], [0], [1], [0, 0, 1, 1], [], []>} : vector<8x32xf32>, vector<32x128xf32>, vector<8x128xf32> -> vector<8x128xf32>
    %103 = math.tanh %102 : vector<8x128xf32>
    %cst_58 = arith.constant 1.000000e+01 : f32
    %104 = vector.broadcast %cst_58 : f32 to vector<8x128xf32>
    %105 = arith.mulf %104, %103 : vector<8x128xf32>
    %106 = arith.addf %105, %35 : vector<8x128xf32>
    %cst_59 = arith.constant dense<0xFF800000> : vector<8xf32>
    %107 = vector.multi_reduction <maximumf>, %106, %cst_59 [1] : vector<8x128xf32> to vector<8xf32>
    %108 = vector.shape_cast %107 : vector<8xf32> to vector<8x1xf32>
    %109 = vector.broadcast %108 : vector<8x1xf32> to vector<8x128xf32>
    %110 = arith.subf %106, %109 : vector<8x128xf32>
    %111 = math.exp %110 : vector<8x128xf32>
    %cst_60 = arith.constant dense<0.000000e+00> : vector<8xf32>
    %112 = vector.multi_reduction <add>, %111, %cst_60 [1] : vector<8x128xf32> to vector<8xf32>
    %113 = vector.shape_cast %112 : vector<8xf32> to vector<8x1xf32>
    %114 = vector.broadcast %113 : vector<8x1xf32> to vector<8x128xf32>
    %115 = arith.divf %111, %114 : vector<8x128xf32>
    %c1_61 = arith.constant 1 : index
    %c0_62 = arith.constant 0 : index
    %c0_63 = arith.constant 0 : index
    %116 = vector.load %arg9[%c1_61, %c0_62, %c0_63] : memref<2x8x128xf32, #tpu.memory_space<vmem>>, vector<1x8x128xf32>
    %117 = vector.shape_cast %116 : vector<1x8x128xf32> to vector<8x128xf32>
    %118 = vector.shape_cast %115 : vector<8x128xf32> to vector<1x8x128xf32>
    tpu.vector_store %arg9[%c1_61, %c0_62, %c0_63], %118 {strides = array<i32>} : memref<2x8x128xf32, #tpu.memory_space<vmem>>, vector<1x8x128xf32>,
    return
  }
  func.func @transform_0(%arg0: i32) -> (i32, i32, i32) {
    %c0_i32 = arith.constant 0 : i32
    %c0_i32_0 = arith.constant 0 : i32
    %c0_i32_1 = arith.constant 0 : i32
    return %arg0, %c0_i32, %c0_i32_0 : i32, i32, i32
  }
  func.func @transform_1(%arg0: i32) -> (i32, i32, i32) {
    %c0_i32 = arith.constant 0 : i32
    %c0_i32_0 = arith.constant 0 : i32
    %c0_i32_1 = arith.constant 0 : i32
    return %arg0, %c0_i32, %c0_i32_0 : i32, i32, i32
  }
  func.func @transform_2(%arg0: i32) -> (i32, i32, i32) {
    %c0_i32 = arith.constant 0 : i32
    %c0_i32_0 = arith.constant 0 : i32
    %c0_i32_1 = arith.constant 0 : i32
    return %arg0, %c0_i32, %c0_i32_0 : i32, i32, i32
  }
  func.func @transform_3(%arg0: i32) -> (i32, i32, i32) {
    %c0_i32 = arith.constant 0 : i32
    %c0_i32_0 = arith.constant 0 : i32
    %c0_i32_1 = arith.constant 0 : i32
    return %arg0, %c0_i32, %c0_i32_0 : i32, i32, i32
  }
  func.func @transform_4(%arg0: i32) -> (i32, i32, i32) {
    %c0_i32 = arith.constant 0 : i32
    %c0_i32_0 = arith.constant 0 : i32
    %c0_i32_1 = arith.constant 0 : i32
    return %arg0, %c0_i32, %c0_i32_0 : i32, i32, i32
  }
  func.func @transform_5(%arg0: i32) -> (i32, i32, i32) {
    %c0_i32 = arith.constant 0 : i32
    %c0_i32_0 = arith.constant 0 : i32
    %c0_i32_1 = arith.constant 0 : i32
    return %arg0, %c0_i32, %c0_i32_0 : i32, i32, i32
  }
  func.func @transform_6(%arg0: i32) -> (i32, i32, i32) {
    %c0_i32 = arith.constant 0 : i32
    %c0_i32_0 = arith.constant 0 : i32
    %c0_i32_1 = arith.constant 0 : i32
    return %arg0, %c0_i32, %c0_i32_0 : i32, i32, i32
  }
  func.func @transform_7(%arg0: i32) -> (i32, i32) {
    %c0_i32 = arith.constant 0 : i32
    %c0_i32_0 = arith.constant 0 : i32
    %c0_i32_1 = arith.constant 0 : i32
    return %c0_i32, %c0_i32_0 : i32, i32
  }
  func.func @transform_8(%arg0: i32) -> (i32, i32, i32) {
    %c0_i32 = arith.constant 0 : i32
    %c0_i32_0 = arith.constant 0 : i32
    %c0_i32_1 = arith.constant 0 : i32
    return %arg0, %c0_i32, %c0_i32_0 : i32, i32, i32
  }
}

</mosaic_0001>

<llo_original>
// kernel: tpu_custom_call.1
$region0: #{tpu_custom_call.1}
  #allocation0 [shape = 'u32[]', space=smem, size = 0x4, offset = 0x4, fixed_abs, tag = 'smem constant byte address 0x4 - core index']
  #allocation1 [shape = 'u32[72,128]{1,0:T(1,128)}', space=vmem, size = 0x9000, scoped, tag = 'internal scratch']
  %s0 = inlined_call_operand.vmem [shape: f32[2,8,32], index: 0, kind: input, shape index: {}]
  %s1 = inlined_call_operand.vmem [shape: f32[2,8,32], index: 1, kind: input, shape index: {}]
  %s2 = inlined_call_operand.vmem [shape: f32[2,32,64], index: 2, kind: input, shape index: {}]
  %s3 = inlined_call_operand.vmem [shape: f32[2,64,32], index: 3, kind: input, shape index: {}]
  %s4 = inlined_call_operand.vmem [shape: f32[2,16,128], index: 4, kind: input, shape index: {}]
  %s5 = inlined_call_operand.vmem [shape: f32[2,32,128], index: 5, kind: input, shape index: {}]
  %s6 = inlined_call_operand.vmem [shape: f32[2,2,64], index: 6, kind: input, shape index: {}]
  %s7 = inlined_call_operand.vmem [shape: f32[200,64], index: 7, kind: input, shape index: {}]
  %s8 = inlined_call_operand.hbm [shape: f32[2,8,128], index: 8, kind: output, shape index: {}]
  %s9 = sld [smem:[#allocation0]]
  $region42: #{tpu_custom_call.1} parent=0
    _
  %s11 = ssub.s32 1, %s9
  %s12 = scalar_select 0, %s11, %s9
  $region1: #{tpu_custom_call.1} parent=0
    #allocation2 [shape = 'u8[8192]{0}', space=vmem, size = 0x2000, scoped, tag = 'output window, operand 0, single buffered']
    #allocation3 [shape = 's32[1]{0}', space=sflag, size = 0x4, scoped, tag = 'scoped memory for tpu_custom_call.1']
    %13 = vsyncpa [#allocation3], 0
    // Predicated region
    $region2: #{tpu_custom_call.1} parent=1 // pred_check
      _
    $region3: #{tpu_custom_call.1} parent=1 // pred_check_branch
      %15 = sbr.rel (0) target = $region5
    $region4: #{tpu_custom_call.1} parent=1 // pred_region
      _
    $region5: #{tpu_custom_call.1} parent=1 // pred_fallthru
      _
    // Predicated region
    $region6: #{tpu_custom_call.1} parent=1 // pred_check
      _
    $region7: #{tpu_custom_call.1} parent=1 // pred_check_branch
      %17 = sbr.rel (0) target = $region9
    $region8: #{tpu_custom_call.1} parent=1 // pred_region
      _
    $region9: #{tpu_custom_call.1} parent=1 // pred_fallthru
      _
    // Predicated region
    $region10: #{tpu_custom_call.1} parent=1 // pred_check
      _
    $region11: #{tpu_custom_call.1} parent=1 // pred_check_branch
      %19 = sbr.rel (0) target = $region13
    $region12: #{tpu_custom_call.1} parent=1 // pred_region
      _
    $region13: #{tpu_custom_call.1} parent=1 // pred_fallthru
      _
    // Predicated region
    $region14: #{tpu_custom_call.1} parent=1 // pred_check
      _
    $region15: #{tpu_custom_call.1} parent=1 // pred_check_branch
      %21 = sbr.rel (0) target = $region17
    $region16: #{tpu_custom_call.1} parent=1 // pred_region
      _
    $region17: #{tpu_custom_call.1} parent=1 // pred_fallthru
      _
    // Predicated region
    $region18: #{tpu_custom_call.1} parent=1 // pred_check
      _
    $region19: #{tpu_custom_call.1} parent=1 // pred_check_branch
      %23 = sbr.rel (0) target = $region21
    $region20: #{tpu_custom_call.1} parent=1 // pred_region
      _
    $region21: #{tpu_custom_call.1} parent=1 // pred_fallthru
      _
    // Predicated region
    $region22: #{tpu_custom_call.1} parent=1 // pred_check
      _
    $region23: #{tpu_custom_call.1} parent=1 // pred_check_branch
      %25 = sbr.rel (0) target = $region25
    $region24: #{tpu_custom_call.1} parent=1 // pred_region
      _
    $region25: #{tpu_custom_call.1} parent=1 // pred_fallthru
      _
    // Predicated region
    $region26: #{tpu_custom_call.1} parent=1 // pred_check
      _
    $region27: #{tpu_custom_call.1} parent=1 // pred_check_branch
      %27 = sbr.rel (0) target = $region29
    $region28: #{tpu_custom_call.1} parent=1 // pred_region
      _
    $region29: #{tpu_custom_call.1} parent=1 // pred_fallthru
      _
    // Predicated region
    $region30: #{tpu_custom_call.1} parent=1 // pred_check
      _
    $region31: #{tpu_custom_call.1} parent=1 // pred_check_branch
      %29 = sbr.rel (0) target = $region33
    $region32: #{tpu_custom_call.1} parent=1 // pred_region
      _
    $region33: #{tpu_custom_call.1} parent=1 // pred_fallthru
      _
    %v30 = vld [vmem:[%s7] sm:$0xff]
    %v31 = vld [vmem:[%s7 + $0x8] sm:$0xff]
    %v32 = vld [vmem:[%s7 + $0x10] sm:$0xff]
    %v33 = vld [vmem:[%s7 + $0x18] sm:$0xff]
    %v34 = vld [vmem:[%s7 + $0x20] sm:$0xff]
    %v35 = vld [vmem:[%s7 + $0x28] sm:$0xff]
    %v36 = vld [vmem:[%s7 + $0x30] sm:$0xff]
    %v37 = vld [vmem:[%s7 + $0x38] sm:$0xff]
    %v38 = vld [vmem:[%s7 + $0x40] sm:$0xff]
    %v39 = vld [vmem:[%s7 + $0x48] sm:$0xff]
    %v40 = vld [vmem:[%s7 + $0x50] sm:$0xff]
    %v41 = vld [vmem:[%s7 + $0x58] sm:$0xff]
    %v42 = vld [vmem:[%s7 + $0x60] sm:$0xff]
    %v43 = vld [vmem:[%s7 + $0x68] sm:$0xff]
    %v44 = vld [vmem:[%s7 + $0x70] sm:$0xff]
    %v45 = vld [vmem:[%s7 + $0x78] sm:$0xff]
    %v46 = vld [vmem:[%s7 + $0x80] sm:$0x1]
    %v47 = vld [vmem:[%s7 + $0x88] sm:$0xff]
    %v48 = vld [vmem:[%s7 + $0x90] sm:$0xff]
    %v49 = vld [vmem:[%s7 + $0x98] sm:$0xff]
    %v50 = vld [vmem:[%s7 + $0xa0] sm:$0xff]
    %v51 = vld [vmem:[%s7 + $0xa8] sm:$0xff]
    %v52 = vld [vmem:[%s7 + $0xb0] sm:$0xff]
    %v53 = vld [vmem:[%s7 + $0xb8] sm:$0xff]
    %v54 = vld [vmem:[%s7 + $0xc0] sm:$0xff]
    %v55 = vld [vmem:[%s0] sm:$0xff]
    %v56 = vld [vmem:[%s0 + $0x8] sm:$0xff]
    %v57 = vld [vmem:[%s1] sm:$0xff]
    %v58 = vld [vmem:[%s1 + $0x8] sm:$0xff]
    %vm59 = vcmask 261120
    %v61 = vsel %vm59, %v55, 0
    %v64 = vsel %vm59, %v56, 0
    %66 = vmatpush.msra.mxu0 0.0
    %67 = vmatpush.msra.mxu0 0.0
    %68 = vmatpush.msra.mxu0 0.0
    %69 = vmatpush.msra.mxu0 0.0
    %70 = vmatpush.msra.mxu0 0.0
    %71 = vmatpush.msra.mxu0 0.0
    %72 = vmatpush.msra.mxu0 0.0
    %73 = vmatpush.msra.mxu0 0.0
    %74 = vmatpush.msra.mxu0 0.0
    %75 = vmatpush.msra.mxu0 0.0
    %76 = vmatpush.msra.mxu0 0.0
    %77 = vmatpush.msra.mxu0 0.0
    %78 = vmatpush.msra.mxu0 %v33
    %79 = vmatpush.msra.mxu0 %v32
    %80 = vmatpush.msra.mxu0 %v31
    %81 = vmatpush.msra.mxu0 %v30
    %82 = vmatmul.f32.gmra.mxu0 %v61
    %v83 = vpop.f32.mrf.mxu0
    %v84 = vadd.f32 0.0, %v83
    %85 = vmatmul.f32.gmra.mxu0 %v64
    %v86 = vpop.f32.mrf.mxu0
    %v87 = vadd.f32 0.0, %v86
    %88 = vdwg.mxu0
    %v89 = vadd.f32 %v57, %v84
    %v90 = vadd.f32 %v58, %v87
    %v91 = vld [vmem:[%s4] sm:$0xff]
    %v92 = vld [vmem:[%s4 + $0x8] sm:$0xff]
    %v93 = vld [vmem:[%s2] sm:$0xff]
    %v94 = vld [vmem:[%s2 + $0x8] sm:$0xff]
    %v95 = vld [vmem:[%s2 + $0x10] sm:$0xff]
    %v96 = vld [vmem:[%s2 + $0x18] sm:$0xff]
    %v98 = vsel %vm59, %v89, 0
    %100 = vmatpush.msra.mxu0 0.0
    %101 = vmatpush.msra.mxu0 0.0
    %102 = vmatpush.msra.mxu0 0.0
    %103 = vmatpush.msra.mxu0 0.0
    %104 = vmatpush.msra.mxu0 0.0
    %105 = vmatpush.msra.mxu0 0.0
    %106 = vmatpush.msra.mxu0 0.0
    %107 = vmatpush.msra.mxu0 0.0
    %108 = vmatpush.msra.mxu0 0.0
    %109 = vmatpush.msra.mxu0 0.0
    %110 = vmatpush.msra.mxu0 0.0
    %111 = vmatpush.msra.mxu0 0.0
    %112 = vmatpush.msra.mxu0 %v96
    %113 = vmatpush.msra.mxu0 %v95
    %114 = vmatpush.msra.mxu0 %v94
    %115 = vmatpush.msra.mxu0 %v93
    %116 = vmatmul.f32.gmra.mxu0 %v98
    %v117 = vpop.f32.mrf.mxu0
    %v118 = vadd.f32 %v91, %v117
    %119 = vdwg.mxu0
    %vm120 = vcmask 523264
    %v121 = vsel %vm120, %v118, -inf
    %122 = vmax.xlane.f32.xlu0 %v121
    %v123 = vpop.xlane.xlu0 %122
    %v124 = vsub.f32 %v118, %v123
    %v125 = vmul.f32 %v124, 1.442695
    %v126 = vpow.pop %v125
    %v128 = vsel %vm120, %v126, 0
    %130 = vmatpush.msra.mxu0 0.0
    %131 = vmatpush.msra.mxu0 0.0
    %132 = vmatpush.msra.mxu0 0.0
    %133 = vmatpush.msra.mxu0 0.0
    %134 = vmatpush.msra.mxu0 0.0
    %135 = vmatpush.msra.mxu0 0.0
    %136 = vmatpush.msra.mxu0 0.0
    %137 = vmatpush.msra.mxu0 0.0
    %138 = vmatpush.msra.mxu0 %v54
    %139 = vmatpush.msra.mxu0 %v53
    %140 = vmatpush.msra.mxu0 %v52
    %141 = vmatpush.msra.mxu0 %v51
    %142 = vmatpush.msra.mxu0 %v50
    %143 = vmatpush.msra.mxu0 %v49
    %144 = vmatpush.msra.mxu0 %v48
    %145 = vmatpush.msra.mxu0 %v47
    %146 = vmatmul.f32.gmra.mxu0 %v128
    %v147 = vpop.f32.mrf.mxu0
    %v148 = vadd.f32 0.0, %v147
    %149 = vdwg.mxu0
    %v150 = vmax.f32 %v148, 1e-30
    %v151 = vrcp.pop %v150
    %v152 = vmul.f32 %v150, %v151
    %v153 = vsub.f32 1.0, %v152
    %v154 = vmul.f32 %v151, %v153
    %v155 = vadd.f32 %v151, %v154
    %vm156 = vweird.f32 %v150
    %vm157 = vweird.f32 %v151
    %vm158 = vmor %vm156, %vm157
    %v159 = vsel %vm158, %v151, %v155
    %v160 = vand.u32 2147483647, %v150
    %vm161 = vcmp.eq.f32.partialorder %v160, 8.507059e+37
    %v162 = vand.u32 %v150, 2147483648
    %v163 = vor.u32 1.1754944e-38, %v162
    %v164 = vsel %vm161, %v163, %v159
    %v165 = vmul.f32 %v126, %v164
    %v166 = vld [vmem:[%s3] sm:$0xff]
    %v167 = vld [vmem:[%s3 + $0x8] sm:$0xff]
    %v168 = vld [vmem:[%s3 + $0x10] sm:$0xff]
    %v169 = vld [vmem:[%s3 + $0x18] sm:$0xff]
    %v170 = vld [vmem:[%s3 + $0x20] sm:$0xff]
    %v171 = vld [vmem:[%s3 + $0x28] sm:$0xff]
    %v172 = vld [vmem:[%s3 + $0x30] sm:$0xff]
    %v173 = vld [vmem:[%s3 + $0x38] sm:$0xff]
    %v175 = vsel %vm120, %v165, 0
    %177 = vmatpush.msra.mxu0 0.0
    %178 = vmatpush.msra.mxu0 0.0
    %179 = vmatpush.msra.mxu0 0.0
    %180 = vmatpush.msra.mxu0 0.0
    %181 = vmatpush.msra.mxu0 0.0
    %182 = vmatpush.msra.mxu0 0.0
    %183 = vmatpush.msra.mxu0 0.0
    %184 = vmatpush.msra.mxu0 0.0
    %185 = vmatpush.msra.mxu0 %v173
    %186 = vmatpush.msra.mxu0 %v172
    %187 = vmatpush.msra.mxu0 %v171
    %188 = vmatpush.msra.mxu0 %v170
    %189 = vmatpush.msra.mxu0 %v169
    %190 = vmatpush.msra.mxu0 %v168
    %191 = vmatpush.msra.mxu0 %v167
    %192 = vmatpush.msra.mxu0 %v166
    %193 = vmatmul.f32.gmra.mxu0 %v175
    %v194 = vpop.f32.mrf.mxu0
    %v195 = vadd.f32 0.0, %v194
    %196 = vdwg.mxu0
    %s197 = scalar_lea.vmem %s4, 16
    %v198 = vld [vmem:[%s197] sm:$0xff]
    %v199 = vld [vmem:[%s197 + $0x8] sm:$0xff]
    %s200 = scalar_lea.vmem %s2, 32
    %v201 = vld [vmem:[%s200] sm:$0xff]
    %v202 = vld [vmem:[%s200 + $0x8] sm:$0xff]
    %v203 = vld [vmem:[%s200 + $0x10] sm:$0xff]
    %v204 = vld [vmem:[%s200 + $0x18] sm:$0xff]
    %v206 = vsel %vm59, %v90, 0
    %208 = vmatpush.msra.mxu0 0.0
    %209 = vmatpush.msra.mxu0 0.0
    %210 = vmatpush.msra.mxu0 0.0
    %211 = vmatpush.msra.mxu0 0.0
    %212 = vmatpush.msra.mxu0 0.0
    %213 = vmatpush.msra.mxu0 0.0
    %214 = vmatpush.msra.mxu0 0.0
    %215 = vmatpush.msra.mxu0 0.0
    %216 = vmatpush.msra.mxu0 0.0
    %217 = vmatpush.msra.mxu0 0.0
    %218 = vmatpush.msra.mxu0 0.0
    %219 = vmatpush.msra.mxu0 0.0
    %220 = vmatpush.msra.mxu0 %v204
    %221 = vmatpush.msra.mxu0 %v203
    %222 = vmatpush.msra.mxu0 %v202
    %223 = vmatpush.msra.mxu0 %v201
    %224 = vmatmul.f32.gmra.mxu0 %v206
    %v225 = vpop.f32.mrf.mxu0
    %v226 = vadd.f32 %v198, %v225
    %227 = vdwg.mxu0
    %v228 = vsel %vm120, %v226, -inf
    %229 = vmax.xlane.f32.xlu0 %v228
    %v230 = vpop.xlane.xlu0 %229
    %v231 = vsub.f32 %v226, %v230
    %v232 = vmul.f32 %v231, 1.442695
    %v233 = vpow.pop %v232
    %v235 = vsel %vm120, %v233, 0
    %237 = vmatpush.msra.mxu0 0.0
    %238 = vmatpush.msra.mxu0 0.0
    %239 = vmatpush.msra.mxu0 0.0
    %240 = vmatpush.msra.mxu0 0.0
    %241 = vmatpush.msra.mxu0 0.0
    %242 = vmatpush.msra.mxu0 0.0
    %243 = vmatpush.msra.mxu0 0.0
    %244 = vmatpush.msra.mxu0 0.0
    %245 = vmatpush.msra.mxu0 %v54
    %246 = vmatpush.msra.mxu0 %v53
    %247 = vmatpush.msra.mxu0 %v52
    %248 = vmatpush.msra.mxu0 %v51
    %249 = vmatpush.msra.mxu0 %v50
    %250 = vmatpush.msra.mxu0 %v49
    %251 = vmatpush.msra.mxu0 %v48
    %252 = vmatpush.msra.mxu0 %v47
    %253 = vmatmul.f32.gmra.mxu0 %v235
    %v254 = vpop.f32.mrf.mxu0
    %v255 = vadd.f32 0.0, %v254
    %256 = vdwg.mxu0
    %v257 = vmax.f32 %v255, 1e-30
    %v258 = vrcp.pop %v257
    %v259 = vmul.f32 %v257, %v258
    %v260 = vsub.f32 1.0, %v259
    %v261 = vmul.f32 %v258, %v260
    %v262 = vadd.f32 %v258, %v261
    %vm263 = vweird.f32 %v257
    %vm264 = vweird.f32 %v258
    %vm265 = vmor %vm263, %vm264
    %v266 = vsel %vm265, %v258, %v262
    %v267 = vand.u32 2147483647, %v257
    %vm268 = vcmp.eq.f32.partialorder %v267, 8.507059e+37
    %v269 = vand.u32 %v257, 2147483648
    %v270 = vor.u32 1.1754944e-38, %v269
    %v271 = vsel %vm268, %v270, %v266
    %v272 = vmul.f32 %v233, %v271
    %s273 = scalar_lea.vmem %s3, 64
    %v274 = vld [vmem:[%s273] sm:$0xff]
    %v275 = vld [vmem:[%s273 + $0x8] sm:$0xff]
    %v276 = vld [vmem:[%s273 + $0x10] sm:$0xff]
    %v277 = vld [vmem:[%s273 + $0x18] sm:$0xff]
    %v278 = vld [vmem:[%s273 + $0x20] sm:$0xff]
    %v279 = vld [vmem:[%s273 + $0x28] sm:$0xff]
    %v280 = vld [vmem:[%s273 + $0x30] sm:$0xff]
    %v281 = vld [vmem:[%s273 + $0x38] sm:$0xff]
    %v283 = vsel %vm120, %v272, 0
    %285 = vmatpush.msra.mxu0 0.0
    %286 = vmatpush.msra.mxu0 0.0
    %287 = vmatpush.msra.mxu0 0.0
    %288 = vmatpush.msra.mxu0 0.0
    %289 = vmatpush.msra.mxu0 0.0
    %290 = vmatpush.msra.mxu0 0.0
    %291 = vmatpush.msra.mxu0 0.0
    %292 = vmatpush.msra.mxu0 0.0
    %293 = vmatpush.msra.mxu0 %v281
    %294 = vmatpush.msra.mxu0 %v280
    %295 = vmatpush.msra.mxu0 %v279
    %296 = vmatpush.msra.mxu0 %v278
    %297 = vmatpush.msra.mxu0 %v277
    %298 = vmatpush.msra.mxu0 %v276
    %299 = vmatpush.msra.mxu0 %v275
    %300 = vmatpush.msra.mxu0 %v274
    %301 = vmatmul.f32.gmra.mxu0 %v283
    %v302 = vpop.f32.mrf.mxu0
    %v303 = vadd.f32 0.0, %v302
    %304 = vdwg.mxu0
    %v305 = vld [vmem:[%s6] sm:$0x3]
    %v306 = vld [vmem:[%s6 + $0x2] sm:$0x3]
    %v307 = vperm.slane %v305, 0
    %v308 = vperm.slane %v306, 0
    %v309 = vperm.slane %v46, 0
    %v311 = vsel %vm59, %v195, 0
    %v314 = vsel %vm59, %v303, 0
    %316 = vmatpush.msra.mxu0 0.0
    %317 = vmatpush.msra.mxu0 0.0
    %318 = vmatpush.msra.mxu0 0.0
    %319 = vmatpush.msra.mxu0 0.0
    %320 = vmatpush.msra.mxu0 0.0
    %321 = vmatpush.msra.mxu0 0.0
    %322 = vmatpush.msra.mxu0 0.0
    %323 = vmatpush.msra.mxu0 0.0
    %324 = vmatpush.msra.mxu0 0.0
    %325 = vmatpush.msra.mxu0 0.0
    %326 = vmatpush.msra.mxu0 0.0
    %327 = vmatpush.msra.mxu0 0.0
    %328 = vmatpush.msra.mxu0 %v37
    %329 = vmatpush.msra.mxu0 %v36
    %330 = vmatpush.msra.mxu0 %v35
    %331 = vmatpush.msra.mxu0 %v34
    %332 = vmatmul.f32.gmra.mxu0 %v311
    %v333 = vpop.f32.mrf.mxu0
    %v334 = vadd.f32 %v309, %v333
    %335 = vmatmul.f32.gmra.mxu0 %v314
    %v336 = vpop.f32.mrf.mxu0
    %v337 = vadd.f32 %v309, %v336
    %338 = vdwg.mxu0
    %v339 = vmax.f32 %v334, 0.0
    %v340 = vmax.f32 %v337, 0.0
    %v341 = vmul.f32 %v339, %v307
    %v342 = vmul.f32 %v340, %v308
    %v344 = vsel %vm120, %v341, 0
    %v347 = vsel %vm120, %v342, 0
    %349 = vmatpush.msra.mxu0 0.0
    %350 = vmatpush.msra.mxu0 0.0
    %351 = vmatpush.msra.mxu0 0.0
    %352 = vmatpush.msra.mxu0 0.0
    %353 = vmatpush.msra.mxu0 0.0
    %354 = vmatpush.msra.mxu0 0.0
    %355 = vmatpush.msra.mxu0 0.0
    %356 = vmatpush.msra.mxu0 0.0
    %357 = vmatpush.msra.mxu0 %v45
    %358 = vmatpush.msra.mxu0 %v44
    %359 = vmatpush.msra.mxu0 %v43
    %360 = vmatpush.msra.mxu0 %v42
    %361 = vmatpush.msra.mxu0 %v41
    %362 = vmatpush.msra.mxu0 %v40
    %363 = vmatpush.msra.mxu0 %v39
    %364 = vmatpush.msra.mxu0 %v38
    %365 = vmatmul.f32.gmra.mxu0 %v344
    %v366 = vpop.f32.mrf.mxu0
    %v367 = vadd.f32 0.0, %v366
    %368 = vmatmul.f32.gmra.mxu0 %v347
    %v369 = vpop.f32.mrf.mxu0
    %v370 = vadd.f32 0.0, %v369
    %371 = vdwg.mxu0
    %v372 = vperm.slane %v305, 1
    %v373 = vadd.f32 %v367, %v372
    %v374 = vld [vmem:[%s5] sm:$0xff]
    %v375 = vld [vmem:[%s5 + $0x8] sm:$0xff]
    %v376 = vld [vmem:[%s5 + $0x10] sm:$0xff]
    %v377 = vld [vmem:[%s5 + $0x18] sm:$0xff]
    %v379 = vsel %vm59, %v373, 0
    %381 = vmatpush.msra.mxu0 0.0
    %382 = vmatpush.msra.mxu0 0.0
    %383 = vmatpush.msra.mxu0 0.0
    %384 = vmatpush.msra.mxu0 0.0
    %385 = vmatpush.msra.mxu0 0.0
    %386 = vmatpush.msra.mxu0 0.0
    %387 = vmatpush.msra.mxu0 0.0
    %388 = vmatpush.msra.mxu0 0.0
    %389 = vmatpush.msra.mxu0 0.0
    %390 = vmatpush.msra.mxu0 0.0
    %391 = vmatpush.msra.mxu0 0.0
    %392 = vmatpush.msra.mxu0 0.0
    %393 = vmatpush.msra.mxu0 %v377
    %394 = vmatpush.msra.mxu0 %v376
    %395 = vmatpush.msra.mxu0 %v375
    %396 = vmatpush.msra.mxu0 %v374
    %397 = vmatmul.f32.gmra.mxu0 %v379
    %v398 = vpop.f32.mrf.mxu0
    %v399 = vadd.f32 0.0, %v398
    %400 = vdwg.mxu0
    %v401 = vtanh.pop %v399
    %v402 = vmul.f32 %v401, 10.0
    %v403 = vadd.f32 %v402, %v92
    %404 = vmax.xlane.f32.xlu0 %v403
    %v405 = vpop.xlane.xlu0 %404
    %v406 = vsub.f32 %v403, %v405
    %v407 = vmul.f32 %v406, 1.442695
    %v408 = vpow.pop %v407
    %409 = vadd.xlane.f32.xlu0 %v408
    %v410 = vpop.xlane.xlu0 %409
    %v411 = vrcp.pop %v410
    %v412 = vmul.f32 %v410, %v411
    %v413 = vsub.f32 1.0, %v412
    %v414 = vmul.f32 %v411, %v413
    %v415 = vadd.f32 %v411, %v414
    %vm416 = vweird.f32 %v410
    %vm417 = vweird.f32 %v411
    %vm418 = vmor %vm416, %vm417
    %v419 = vsel %vm418, %v411, %v415
    %v420 = vand.u32 2147483647, %v410
    %vm421 = vcmp.eq.f32.partialorder %v420, 8.507059e+37
    %v422 = vand.u32 %v410, 2147483648
    %v423 = vor.u32 1.1754944e-38, %v422
    %v424 = vsel %vm421, %v423, %v419
    %v425 = vmul.f32 %v408, %v424
    %426 = vst [vmem:[#allocation2] sm:$0xff] %v425
    %v427 = vperm.slane %v306, 1
    %v428 = vadd.f32 %v370, %v427
    %s429 = scalar_lea.vmem %s5, 32
    %v430 = vld [vmem:[%s429] sm:$0xff]
    %v431 = vld [vmem:[%s429 + $0x8] sm:$0xff]
    %v432 = vld [vmem:[%s429 + $0x10] sm:$0xff]
    %v433 = vld [vmem:[%s429 + $0x18] sm:$0xff]
    %v435 = vsel %vm59, %v428, 0
    %437 = vmatpush.msra.mxu0 0.0
    %438 = vmatpush.msra.mxu0 0.0
    %439 = vmatpush.msra.mxu0 0.0
    %440 = vmatpush.msra.mxu0 0.0
    %441 = vmatpush.msra.mxu0 0.0
    %442 = vmatpush.msra.mxu0 0.0
    %443 = vmatpush.msra.mxu0 0.0
    %444 = vmatpush.msra.mxu0 0.0
    %445 = vmatpush.msra.mxu0 0.0
    %446 = vmatpush.msra.mxu0 0.0
    %447 = vmatpush.msra.mxu0 0.0
    %448 = vmatpush.msra.mxu0 0.0
    %449 = vmatpush.msra.mxu0 %v433
    %450 = vmatpush.msra.mxu0 %v432
    %451 = vmatpush.msra.mxu0 %v431
    %452 = vmatpush.msra.mxu0 %v430
    %453 = vmatmul.f32.gmra.mxu0 %v435
    %v454 = vpop.f32.mrf.mxu0
    %v455 = vadd.f32 0.0, %v454
    %456 = vdwg.mxu0
    %v457 = vtanh.pop %v455
    %v458 = vmul.f32 %v457, 10.0
    %v459 = vadd.f32 %v458, %v199
    %460 = vmax.xlane.f32.xlu0 %v459
    %v461 = vpop.xlane.xlu0 %460
    %v462 = vsub.f32 %v459, %v461
    %v463 = vmul.f32 %v462, 1.442695
    %v464 = vpow.pop %v463
    %465 = vadd.xlane.f32.xlu0 %v464
    %v466 = vpop.xlane.xlu0 %465
    %v467 = vrcp.pop %v466
    %v468 = vmul.f32 %v466, %v467
    %v469 = vsub.f32 1.0, %v468
    %v470 = vmul.f32 %v467, %v469
    %v471 = vadd.f32 %v467, %v470
    %vm472 = vweird.f32 %v466
    %vm473 = vweird.f32 %v467
    %vm474 = vmor %vm472, %vm473
    %v475 = vsel %vm474, %v467, %v471
    %v476 = vand.u32 2147483647, %v466
    %vm477 = vcmp.eq.f32.partialorder %v476, 8.507059e+37
    %v478 = vand.u32 %v466, 2147483648
    %v479 = vor.u32 1.1754944e-38, %v478
    %v480 = vsel %vm477, %v479, %v475
    %v481 = vmul.f32 %v464, %v480
    %s482 = scalar_lea.vmem [#allocation2], 8
    %483 = vst [vmem:[%s482] sm:$0xff] %v481
    // Predicated region
    $region34: #{tpu_custom_call.1} parent=1 // pred_check
      _
    $region35: #{tpu_custom_call.1} parent=1 // pred_check_branch
      %485 = sbr.rel (0) target = $region37
    $region36: #{tpu_custom_call.1} parent=1 // pred_region
      %487 = vsyncadd [#allocation3], 0
      %s488 = sshll.u32 [#allocation2], 4
      %s489 = int_to_ptr.vmem [resolvable:$true] %s488
      %s490 = sshll.u32 %s8, 4
      %s491 = int_to_ptr.hbm [resolvable:$true] %s490
      %496 = dma.vmem_to_hbm [thread:$0]  %s489, 256, %s491, [#allocation3], 128, 128, 8
    $region37: #{tpu_custom_call.1} parent=1 // pred_fallthru
      _
    // Predicated region
    $region38: #{tpu_custom_call.1} parent=1 // pred_check
      _
    $region39: #{tpu_custom_call.1} parent=1 // pred_check_branch
      %498 = sbr.rel (0) target = $region41
    $region40: #{tpu_custom_call.1} parent=1 // pred_region
      %500 = dma.done [#allocation3], 256
    $region41: #{tpu_custom_call.1} parent=1 // pred_fallthru
      _
    %501 = vsyncpa [#allocation3], 1

</llo_original>
